<compile_context>
chip_gen: v5e
topology: v5e:2x2
jax: 0.10.0
libtpu: 0.0.40
codegen_flags: <defaults>
</compile_context>

<pallas_src>
import jax
import jax.numpy as jnp
from jax.experimental import pallas as pl
from jax.experimental.pallas import tpu as pltpu


def attention_kernel(x_ref, wa_ref, ua_ref, bias_ref, va_ref, o_ref):
    # x_ref block: (Bt, S, H) batch tile, in the activation's native dtype.
    x = x_ref[...]
    Bt, S, H = x.shape

    # Wa(lstm_output): collapse (Bt, S) for one big 2-D MXU matmul.  With S a
    # multiple of the 8-row sublane tile this collapse is layout-preserving
    # (no VMEM copy).  Operands stay native dtype; accumulate in f32.
    wa_out = jnp.dot(
        x.reshape(Bt * S, H), wa_ref[...],
        preferred_element_type=jnp.float32,
    ).reshape(Bt, S, H)

    # Ua(hidden), hidden = last time step, one (Bt, H) @ (H, H) matmul.
    hidden = x[:, S - 1, :]
    ua_out = jnp.dot(hidden, ua_ref[...], preferred_element_type=jnp.float32)

    # ba + bu are pre-folded into a single f32 (1, H) bias in the wrapper.
    t = jnp.tanh(wa_out + ua_out[:, None, :] + bias_ref[...])     # (Bt, S, H) f32

    # Va(.) as a VPU multiply + lane reduction (va_ref is the (1, H) weight row).
    # The Va bias cancels in the softmax and is intentionally omitted.
    score = jnp.sum(t * va_ref[...], axis=-1)                     # (Bt, S) f32

    # Softmax over the sequence axis (PyTorch dim=1), exact reciprocal.
    m = jnp.max(score, axis=-1, keepdims=True)
    e = jnp.exp(score - m)
    w = e / jnp.sum(e, axis=-1, keepdims=True)                    # (Bt, S) f32

    # context = sum over seq of weights * lstm_output -> lane-dense (Bt, H) store.
    ctx = jnp.sum(w[:, :, None] * x, axis=1)                      # (Bt, H) f32
    o_ref[...] = ctx.astype(o_ref.dtype)


def _constant_spec(shape):
    """BlockSpec for a grid-invariant (resident) operand; single-buffered when
    pipeline_mode is available so it doesn't double its VMEM footprint."""
    index_map = lambda b: (0,) * len(shape)
    buffered = getattr(pl, "Buffered", None)
    if buffered is not None:
        try:
            return pl.BlockSpec(shape, index_map,
                                pipeline_mode=buffered(buffer_count=1))
        except Exception:  # older jax: no pipeline_mode kwarg / different ctor
            pass
    return pl.BlockSpec(shape, index_map)


def _pick_block_b(B, S, H, x_itemsize, w_itemsize, vmem_budget_bytes):
    """Largest batch tile that fits the VMEM budget, constrained to == B or a
    multiple of 8 (keeps the output store unmasked)."""
    resident = 2 * H * H * w_itemsize + 2 * H * 4          # Wa, Ua, bias, Va row
    per_row = S * H * (2 * x_itemsize + 3 * 4) \
        + 2 * H * x_itemsize                               # x (2-buf) + f32 temps + out
    avail = max(vmem_budget_bytes - resident, per_row)
    fit = max(int(avail // per_row), 1)
    if fit >= B:
        return B
    # Largest multiple of 8 that divides B and fits; else largest divisor that fits.
    mults = [d for d in range(8, fit + 1, 8) if B % d == 0]
    if mults:
        return mults[-1]
    divisors = [d for d in range(1, min(fit, B) + 1) if B % d == 0]
    return divisors[-1]


def attention_forward(lstm_output, wa, ba, ua, bu, va, bv=None, *,
                      block_b=None, vmem_budget_bytes=None):
    """lstm_output: (B, S, H).  wa/ua: (H, H) stored as (in, out) = W^T;
    ba/bu: (H,); va: (H, 1).  bv is accepted for API parity but, being a uniform
    pre-softmax shift, never reaches the kernel.

    v7x note: pass vmem_budget_bytes ~ 24-28 MiB (64 MiB physical VMEM) and a
    block_b (multiple of 8) that yields an even grid length >= 4 so both
    TensorCores get pipelined work."""
    B, S, H = lstm_output.shape
    x_dtype = lstm_output.dtype
    x_itemsize = jnp.dtype(x_dtype).itemsize

    # MXU operands in the activation's native dtype (bf16 stays bf16);
    # elementwise (tanh / softmax / context) path stays f32.
    wa_m = wa.astype(x_dtype)
    ua_m = ua.astype(x_dtype)
    w_itemsize = jnp.dtype(wa_m.dtype).itemsize
    bias = (jnp.reshape(ba, (1, H)) + jnp.reshape(bu, (1, H))).astype(jnp.float32)
    va_row = jnp.reshape(va, (1, H)).astype(jnp.float32)

    if vmem_budget_bytes is None:
        vmem_budget_bytes = 32 * 1024 * 1024   # conservative across v5e/v6e/v7x
    if block_b is None:
        block_b = _pick_block_b(B, S, H, x_itemsize, w_itemsize, vmem_budget_bytes)
    assert B % block_b == 0, "block_b must divide the batch size"
    assert block_b == B or block_b % 8 == 0, \
        "block_b must be the full batch or a multiple of 8"

    grid = (B // block_b,)

    # Explicit VMEM limit derived from the actual tiling (+2x headroom).
    need = (2 * block_b * S * H * x_itemsize          # double-buffered x tile
            + 2 * H * H * w_itemsize + 2 * H * 4      # resident weights / bias
            + 3 * block_b * S * H * 4                 # live f32 temporaries
            + 2 * block_b * H * x_itemsize)           # double-buffered out tile
    vmem_limit = int(min(max(2 * need, 16 * 1024 * 1024), 100 * 1024 * 1024))

    cost = pl.CostEstimate(
        flops=2 * B * S * H * H + 2 * B * H * H + 6 * B * S * H,
        transcendentals=B * S * H + B * S,
        bytes_accessed=(B * S * H + B * H) * x_itemsize
        + 2 * H * H * w_itemsize + 2 * H * 4,
    )

    return pl.pallas_call(
        attention_kernel,
        out_shape=jax.ShapeDtypeStruct((B, H), x_dtype),
        grid_spec=pltpu.PrefetchScalarGridSpec(
            num_scalar_prefetch=0,
            grid=grid,
            in_specs=[
                pl.BlockSpec((block_b, S, H), lambda b: (b, 0, 0)),  # x tile
                _constant_spec((H, H)),                              # Wa^T (resident)
                _constant_spec((H, H)),                              # Ua^T (resident)
                _constant_spec((1, H)),                              # ba + bu (f32)
                _constant_spec((1, H)),                              # Va row (f32)
            ],
            out_specs=pl.BlockSpec((block_b, H), lambda b: (b, 0)),
        ),
        compiler_params=pltpu.CompilerParams(
            dimension_semantics=("parallel",),
            vmem_limit_bytes=vmem_limit,
        ),
        cost_estimate=cost,
    )(lstm_output, wa_m, ua_m, bias, va_row)


def attention_reference(lstm_output, wa, ba, ua, bu, va, bv):
    hp = jax.lax.Precision.HIGHEST
    hidden = lstm_output[:, -1, :]
    wa_out = jnp.einsum("bsh,hk->bsk", lstm_output, wa, precision=hp) + ba
    ua_out = jnp.dot(hidden, ua, precision=hp) + bu
    score = jnp.einsum("bsh,hk->bsk", jnp.tanh(wa_out + ua_out[:, None, :]),
                       va, precision=hp) + bv
    weights = jax.nn.softmax(score, axis=1)
    return jnp.sum(weights * lstm_output, axis=1)


if __name__ == "__main__":
    B, S, H = 2, 8, 32

    key = jax.random.PRNGKey(0)
    k_x, k_wa, k_ba, k_ua, k_bu, k_va, k_bv = jax.random.split(key, 7)

    lstm_output = jax.random.normal(k_x, (B, S, H), dtype=jnp.float32)

    # Deterministic nn.Linear-style parameters, stored as (in, out) = W^T.
    scale = 1.0 / jnp.sqrt(H)
    wa = jax.random.uniform(k_wa, (H, H), jnp.float32, -scale, scale)
    ba = jax.random.uniform(k_ba, (H,), jnp.float32, -scale, scale)
    ua = jax.random.uniform(k_ua, (H, H), jnp.float32, -scale, scale)
    bu = jax.random.uniform(k_bu, (H,), jnp.float32, -scale, scale)
    va = jax.random.uniform(k_va, (H, 1), jnp.float32, -scale, scale)
    bv = jax.random.uniform(k_bv, (1,), jnp.float32, -scale, scale)

    out = attention_forward(lstm_output, wa, ba, ua, bu, va, bv)
    out = jax.block_until_ready(out)

    ref = attention_reference(lstm_output, wa, ba, ua, bu, va, bv)
    assert out.shape == (B, H)
    assert jnp.allclose(out, ref, atol=1e-4, rtol=1e-4), "mismatch vs reference"

    print("KERNEL_OK")
</pallas_src>

<mosaic_0001>
module attributes {stable_mosaic.version = 11 : i64} {
  func.func @attention_kernel(%arg0: i32, %arg1: memref<2x8x32xf32, #tpu.memory_space<vmem>>, %arg2: memref<32x32xf32, #tpu.memory_space<vmem>>, %arg3: memref<32x32xf32, #tpu.memory_space<vmem>>, %arg4: memref<1x32xf32, #tpu.memory_space<vmem>>, %arg5: memref<1x32xf32, #tpu.memory_space<vmem>>, %arg6: memref<2x32xf32, #tpu.memory_space<vmem>>) attributes {dimension_semantics = [#tpu.dimension_semantics<parallel>], iteration_bounds = array<i64: 1>, scalar_prefetch = 0 : i64, scratch_operands = 0 : i64, tpu.core_type = #tpu.core_type<tc>, window_params = [{transform_indices = @transform_0, window_bounds = array<i64: 2, 8, 32>}, {pipeline_mode = #tpu.pipeline_mode<synchronous>, transform_indices = @transform_1, window_bounds = array<i64: 32, 32>}, {pipeline_mode = #tpu.pipeline_mode<synchronous>, transform_indices = @transform_2, window_bounds = array<i64: 32, 32>}, {pipeline_mode = #tpu.pipeline_mode<synchronous>, transform_indices = @transform_3, window_bounds = array<i64: 1, 32>}, {pipeline_mode = #tpu.pipeline_mode<synchronous>, transform_indices = @transform_4, window_bounds = array<i64: 1, 32>}, {transform_indices = @transform_5, window_bounds = array<i64: 2, 32>}]} {
    %c0 = arith.constant 0 : index
    %c0_0 = arith.constant 0 : index
    %c0_1 = arith.constant 0 : index
    %0 = vector.load %arg1[%c0, %c0_0, %c0_1] : memref<2x8x32xf32, #tpu.memory_space<vmem>>, vector<2x8x32xf32>
    %1 = vector.shape_cast %0 : vector<2x8x32xf32> to vector<16x32xf32>
    %c0_2 = arith.constant 0 : index
    %c0_3 = arith.constant 0 : index
    %2 = vector.load %arg2[%c0_2, %c0_3] : memref<32x32xf32, #tpu.memory_space<vmem>>, vector<32x32xf32>
    %cst = arith.constant dense<0.000000e+00> : vector<16x32xf32>
    %3 = tpu.matmul %1, %2, %cst {dimension_numbers = #tpu.dot_dimension_numbers<[1], [0], [0], [1], [0, 0, 1, 1], [], []>} : vector<16x32xf32>, vector<32x32xf32>, vector<16x32xf32> -> vector<16x32xf32>
    %4 = vector.shape_cast %3 : vector<16x32xf32> to vector<2x8x32xf32>
    %5 = vector.extract_strided_slice %0 {offsets = [0, 7, 0], sizes = [2, 1, 32], strides = [1, 1, 1]} : vector<2x8x32xf32> to vector<2x1x32xf32>
    %6 = vector.shape_cast %5 : vector<2x1x32xf32> to vector<2x32xf32>
    %c0_4 = arith.constant 0 : index
    %c0_5 = arith.constant 0 : index
    %7 = vector.load %arg3[%c0_4, %c0_5] : memref<32x32xf32, #tpu.memory_space<vmem>>, vector<32x32xf32>
    %cst_6 = arith.constant dense<0.000000e+00> : vector<2x32xf32>
    %8 = tpu.matmul %6, %7, %cst_6 {dimension_numbers = #tpu.dot_dimension_numbers<[1], [0], [0], [1], [0, 0, 1, 1], [], []>} : vector<2x32xf32>, vector<32x32xf32>, vector<2x32xf32> -> vector<2x32xf32>
    %9 = vector.shape_cast %8 : vector<2x32xf32> to vector<2x1x32xf32>
    %10 = vector.broadcast %9 : vector<2x1x32xf32> to vector<2x8x32xf32>
    %11 = arith.addf %4, %10 : vector<2x8x32xf32>
    %c0_7 = arith.constant 0 : index
    %c0_8 = arith.constant 0 : index
    %12 = vector.load %arg4[%c0_7, %c0_8] : memref<1x32xf32, #tpu.memory_space<vmem>>, vector<1x32xf32>
    %13 = vector.shape_cast %12 : vector<1x32xf32> to vector<1x1x32xf32>
    %14 = vector.broadcast %13 : vector<1x1x32xf32> to vector<2x8x32xf32>
    %15 = arith.addf %11, %14 : vector<2x8x32xf32>
    %16 = math.tanh %15 : vector<2x8x32xf32>
    %c0_9 = arith.constant 0 : index
    %c0_10 = arith.constant 0 : index
    %17 = vector.load %arg5[%c0_9, %c0_10] : memref<1x32xf32, #tpu.memory_space<vmem>>, vector<1x32xf32>
    %18 = vector.shape_cast %17 : vector<1x32xf32> to vector<1x1x32xf32>
    %19 = vector.broadcast %18 : vector<1x1x32xf32> to vector<2x8x32xf32>
    %20 = arith.mulf %16, %19 : vector<2x8x32xf32>
    %cst_11 = arith.constant dense<0.000000e+00> : vector<2x8xf32>
    %21 = vector.multi_reduction <add>, %20, %cst_11 [2] : vector<2x8x32xf32> to vector<2x8xf32>
    %cst_12 = arith.constant dense<0xFF800000> : vector<2xf32>
    %22 = vector.multi_reduction <maximumf>, %21, %cst_12 [1] : vector<2x8xf32> to vector<2xf32>
    %23 = vector.shape_cast %22 : vector<2xf32> to vector<2x1xf32>
    %24 = vector.broadcast %23 : vector<2x1xf32> to vector<2x8xf32>
    %25 = arith.subf %21, %24 : vector<2x8xf32>
    %26 = math.exp %25 : vector<2x8xf32>
    %cst_13 = arith.constant dense<0.000000e+00> : vector<2xf32>
    %27 = vector.multi_reduction <add>, %26, %cst_13 [1] : vector<2x8xf32> to vector<2xf32>
    %28 = vector.shape_cast %27 : vector<2xf32> to vector<2x1xf32>
    %29 = vector.broadcast %28 : vector<2x1xf32> to vector<2x8xf32>
    %30 = arith.divf %26, %29 : vector<2x8xf32>
    %31 = vector.shape_cast %30 : vector<2x8xf32> to vector<2x8x1xf32>
    %32 = vector.broadcast %31 : vector<2x8x1xf32> to vector<2x8x32xf32>
    %33 = arith.mulf %32, %0 : vector<2x8x32xf32>
    %cst_14 = arith.constant dense<0.000000e+00> : vector<2x32xf32>
    %34 = vector.multi_reduction <add>, %33, %cst_14 [1] : vector<2x8x32xf32> to vector<2x32xf32>
    %c0_15 = arith.constant 0 : index
    %c0_16 = arith.constant 0 : index
    %35 = vector.load %arg6[%c0_15, %c0_16] : memref<2x32xf32, #tpu.memory_space<vmem>>, vector<2x32xf32>
    tpu.vector_store %arg6[%c0_15, %c0_16], %34 {strides = array<i32>} : memref<2x32xf32, #tpu.memory_space<vmem>>, vector<2x32xf32>,
    return
  }
  func.func @transform_0(%arg0: i32) -> (i32, i32, i32) {
    %c0_i32 = arith.constant 0 : i32
    %c0_i32_0 = arith.constant 0 : i32
    %c0_i32_1 = arith.constant 0 : i32
    return %arg0, %c0_i32, %c0_i32_0 : i32, i32, i32
  }
  func.func @transform_1(%arg0: i32) -> (i32, i32) {
    %c0_i32 = arith.constant 0 : i32
    %c0_i32_0 = arith.constant 0 : i32
    %c0_i32_1 = arith.constant 0 : i32
    return %c0_i32, %c0_i32_0 : i32, i32
  }
  func.func @transform_2(%arg0: i32) -> (i32, i32) {
    %c0_i32 = arith.constant 0 : i32
    %c0_i32_0 = arith.constant 0 : i32
    %c0_i32_1 = arith.constant 0 : i32
    return %c0_i32, %c0_i32_0 : i32, i32
  }
  func.func @transform_3(%arg0: i32) -> (i32, i32) {
    %c0_i32 = arith.constant 0 : i32
    %c0_i32_0 = arith.constant 0 : i32
    %c0_i32_1 = arith.constant 0 : i32
    return %c0_i32, %c0_i32_0 : i32, i32
  }
  func.func @transform_4(%arg0: i32) -> (i32, i32) {
    %c0_i32 = arith.constant 0 : i32
    %c0_i32_0 = arith.constant 0 : i32
    %c0_i32_1 = arith.constant 0 : i32
    return %c0_i32, %c0_i32_0 : i32, i32
  }
  func.func @transform_5(%arg0: i32) -> (i32, i32) {
    %c0_i32 = arith.constant 0 : i32
    %c0_i32_0 = arith.constant 0 : i32
    return %arg0, %c0_i32 : i32, i32
  }
}

</mosaic_0001>

<llo_original>
// kernel: tpu_custom_call.1
$region0: #{tpu_custom_call.1}
  #allocation0 [shape = 'u32[]', space=smem, size = 0x4, offset = 0x4, fixed_abs, tag = 'smem constant byte address 0x4 - core index']
  #allocation1 [shape = 'u32[72,128]{1,0:T(1,128)}', space=vmem, size = 0x9000, scoped, tag = 'internal scratch']
  %s0 = inlined_call_operand.hbm [shape: f32[2,8,32], index: 0, kind: input, shape index: {}]
  %s1 = inlined_call_operand.hbm [shape: f32[32,32], index: 1, kind: input, shape index: {}]
  %s2 = inlined_call_operand.hbm [shape: f32[32,32], index: 2, kind: input, shape index: {}]
  %s3 = inlined_call_operand.vmem [shape: f32[1,32], index: 3, kind: input, shape index: {}]
  %s4 = inlined_call_operand.vmem [shape: f32[1,32], index: 4, kind: input, shape index: {}]
  %s5 = inlined_call_operand.hbm [shape: f32[2,32], index: 5, kind: output, shape index: {}]
  %s6 = sld [smem:[#allocation0]]
  $region42: #{tpu_custom_call.1} parent=0
    _
  %s8 = ssub.s32 1, %s6
  %s9 = scalar_select 0, %s8, %s6
  $region1: #{tpu_custom_call.1} parent=0
    #allocation2 [shape = 'u8[8192]{0}', space=vmem, size = 0x2000, scoped, tag = 'input window, operand 0, single buffered']
    #allocation3 [shape = 's32[1]{0}', space=sflag, size = 0x4, scoped, tag = 'scoped memory for tpu_custom_call.1']
    #allocation4 [shape = 's32[1]{0}', space=sflag, size = 0x4, scoped, tag = 'scoped memory for tpu_custom_call.1']
    #allocation5 [shape = 'u8[16384]{0}', space=vmem, size = 0x4000, scoped, tag = 'input window, operand 1, single buffered']
    #allocation6 [shape = 's32[1]{0}', space=sflag, size = 0x4, scoped, tag = 'scoped memory for tpu_custom_call.1']
    #allocation7 [shape = 'u8[16384]{0}', space=vmem, size = 0x4000, scoped, tag = 'input window, operand 2, single buffered']
    #allocation8 [shape = 'u8[1024]{0}', space=vmem, size = 0x400, scoped, tag = 'output window, operand 0, single buffered']
    %10 = vsyncpa [#allocation3], 0
    %11 = vsyncpa [#allocation6], 0
    %12 = vsyncpa [#allocation4], 0
    // Predicated region
    $region2: #{tpu_custom_call.1} parent=1 // pred_check
      _
    $region3: #{tpu_custom_call.1} parent=1 // pred_check_branch
      %14 = sbr.rel (0) target = $region5
    $region4: #{tpu_custom_call.1} parent=1 // pred_region
      %16 = vsyncadd [#allocation3], 0
      %s17 = sshll.u32 %s0, 4
      %s18 = int_to_ptr.hbm [resolvable:$true] %s17
      %s19 = sshll.u32 [#allocation2], 4
      %s20 = int_to_ptr.vmem [resolvable:$true] %s19
      %25 = dma.hbm_to_vmem [thread:$0]  %s18, 256, %s20, [#allocation3], 128, 128, 8
    $region5: #{tpu_custom_call.1} parent=1 // pred_fallthru
      _
    // Predicated region
    $region6: #{tpu_custom_call.1} parent=1 // pred_check
      _
    $region7: #{tpu_custom_call.1} parent=1 // pred_check_branch
      %27 = sbr.rel (0) target = $region9
    $region8: #{tpu_custom_call.1} parent=1 // pred_region
      %29 = vsyncadd [#allocation6], 0
      %s30 = sshll.u32 %s1, 4
      %s31 = int_to_ptr.hbm [resolvable:$true] %s30
      %s32 = sshll.u32 [#allocation5], 4
      %s33 = int_to_ptr.vmem [resolvable:$true] %s32
      %38 = dma.hbm_to_vmem [thread:$0]  %s31, 512, %s33, [#allocation6], 128, 128, 8
    $region9: #{tpu_custom_call.1} parent=1 // pred_fallthru
      _
    // Predicated region
    $region10: #{tpu_custom_call.1} parent=1 // pred_check
      _
    $region11: #{tpu_custom_call.1} parent=1 // pred_check_branch
      %40 = sbr.rel (0) target = $region13
    $region12: #{tpu_custom_call.1} parent=1 // pred_region
      %42 = vsyncadd [#allocation6], 0
      %s43 = sshll.u32 %s2, 4
      %s44 = int_to_ptr.hbm [resolvable:$true] %s43
      %s45 = sshll.u32 [#allocation7], 4
      %s46 = int_to_ptr.vmem [resolvable:$true] %s45
      %51 = dma.hbm_to_vmem [thread:$0]  %s44, 512, %s46, [#allocation6], 128, 128, 8
    $region13: #{tpu_custom_call.1} parent=1 // pred_fallthru
      _
    // Predicated region
    $region14: #{tpu_custom_call.1} parent=1 // pred_check
      _
    $region15: #{tpu_custom_call.1} parent=1 // pred_check_branch
      %53 = sbr.rel (0) target = $region17
    $region16: #{tpu_custom_call.1} parent=1 // pred_region
      _
    $region17: #{tpu_custom_call.1} parent=1 // pred_fallthru
      _
    // Predicated region
    $region18: #{tpu_custom_call.1} parent=1 // pred_check
      _
    $region19: #{tpu_custom_call.1} parent=1 // pred_check_branch
      %55 = sbr.rel (0) target = $region21
    $region20: #{tpu_custom_call.1} parent=1 // pred_region
      _
    $region21: #{tpu_custom_call.1} parent=1 // pred_fallthru
      _
    // Predicated region
    $region22: #{tpu_custom_call.1} parent=1 // pred_check
      _
    $region23: #{tpu_custom_call.1} parent=1 // pred_check_branch
      %57 = sbr.rel (0) target = $region25
    $region24: #{tpu_custom_call.1} parent=1 // pred_region
      %59 = dma.done [#allocation3], 256
    $region25: #{tpu_custom_call.1} parent=1 // pred_fallthru
      _
    // Predicated region
    $region26: #{tpu_custom_call.1} parent=1 // pred_check
      _
    $region27: #{tpu_custom_call.1} parent=1 // pred_check_branch
      %61 = sbr.rel (0) target = $region29
    $region28: #{tpu_custom_call.1} parent=1 // pred_region
      %63 = dma.done [#allocation6], 512
    $region29: #{tpu_custom_call.1} parent=1 // pred_fallthru
      _
    // Predicated region
    $region30: #{tpu_custom_call.1} parent=1 // pred_check
      _
    $region31: #{tpu_custom_call.1} parent=1 // pred_check_branch
      %65 = sbr.rel (0) target = $region33
    $region32: #{tpu_custom_call.1} parent=1 // pred_region
      %67 = dma.done [#allocation6], 512
    $region33: #{tpu_custom_call.1} parent=1 // pred_fallthru
      _
    %v68 = vld [vmem:[#allocation2] sm:$0xff]
    %v69 = vld [vmem:[#allocation2 + $0x8] sm:$0xff]
    %v70 = vld [vmem:[#allocation5] sm:$0xff]
    %v71 = vld [vmem:[#allocation5 + $0x8] sm:$0xff]
    %v72 = vld [vmem:[#allocation5 + $0x10] sm:$0xff]
    %v73 = vld [vmem:[#allocation5 + $0x18] sm:$0xff]
    %vm74 = vcmask 261120
    %v76 = vsel %vm74, %v68, 0
    %v79 = vsel %vm74, %v69, 0
    %81 = vmatpush.msra.mxu0 0.0
    %82 = vmatpush.msra.mxu0 0.0
    %83 = vmatpush.msra.mxu0 0.0
    %84 = vmatpush.msra.mxu0 0.0
    %85 = vmatpush.msra.mxu0 0.0
    %86 = vmatpush.msra.mxu0 0.0
    %87 = vmatpush.msra.mxu0 0.0
    %88 = vmatpush.msra.mxu0 0.0
    %89 = vmatpush.msra.mxu0 0.0
    %90 = vmatpush.msra.mxu0 0.0
    %91 = vmatpush.msra.mxu0 0.0
    %92 = vmatpush.msra.mxu0 0.0
    %93 = vmatpush.msra.mxu0 %v73
    %94 = vmatpush.msra.mxu0 %v72
    %95 = vmatpush.msra.mxu0 %v71
    %96 = vmatpush.msra.mxu0 %v70
    %97 = vmatmul.f32.gmra.mxu0 %v76
    %v98 = vpop.f32.mrf.mxu0
    %v99 = vadd.f32 0.0, %v98
    %100 = vmatmul.f32.gmra.mxu0 %v79
    %v101 = vpop.f32.mrf.mxu0
    %v102 = vadd.f32 0.0, %v101
    %103 = vdwg.mxu0
    %v104 = vld [vmem:[#allocation7] sm:$0xff]
    %v105 = vld [vmem:[#allocation7 + $0x8] sm:$0xff]
    %v106 = vld [vmem:[#allocation7 + $0x10] sm:$0xff]
    %v107 = vld [vmem:[#allocation7 + $0x18] sm:$0xff]
    %v108 = vrot.slane %v68, 7
    %v109 = vrot.slane %v69, 6
    %vm110 = vcmask 1041409
    %v111 = vsel %vm110, %v109, %v108
    %v112 = vsel %vm74, %v111, 0
    %114 = vmatpush.msra.mxu0 0.0
    %115 = vmatpush.msra.mxu0 0.0
    %116 = vmatpush.msra.mxu0 0.0
    %117 = vmatpush.msra.mxu0 0.0
    %118 = vmatpush.msra.mxu0 0.0
    %119 = vmatpush.msra.mxu0 0.0
    %120 = vmatpush.msra.mxu0 0.0
    %121 = vmatpush.msra.mxu0 0.0
    %122 = vmatpush.msra.mxu0 0.0
    %123 = vmatpush.msra.mxu0 0.0
    %124 = vmatpush.msra.mxu0 0.0
    %125 = vmatpush.msra.mxu0 0.0
    %126 = vmatpush.msra.mxu0 %v107
    %127 = vmatpush.msra.mxu0 %v106
    %128 = vmatpush.msra.mxu0 %v105
    %129 = vmatpush.msra.mxu0 %v104
    %130 = vmatmul.f32.gmra.mxu0 %v112
    %v131 = vpop.f32.mrf.mxu0
    %v132 = vadd.f32 0.0, %v131
    %133 = vdwg.mxu0
    %v135 = vrot.slane %v132, 1
    %v136 = vperm.slane %v132, 0
    %v137 = vperm.slane %v135, 0
    %v140 = vadd.f32 %v99, %v136
    %v141 = vadd.f32 %v102, %v137
    %v142 = vld [vmem:[%s3] sm:$0x1]
    %v144 = vperm.slane %v142, 0
    %v146 = vadd.f32 %v140, %v144
    %v147 = vadd.f32 %v141, %v144
    %v148 = vtanh.pop %v146
    %v149 = vtanh.pop %v147
    %v150 = vld [vmem:[%s4] sm:$0x1]
    %v152 = vperm.slane %v150, 0
    %v154 = vmul.f32 %v148, %v152
    %v155 = vmul.f32 %v149, %v152
    %v156 = vsel %vm74, %v154, 0.0
    %157 = vadd.xlane.f32.xlu0 %v156
    %v158 = vpop.xlane.xlu0 %157
    %v159 = vsel %vm74, %v155, 0.0
    %160 = vadd.xlane.f32.xlu0 %v159
    %v161 = vpop.xlane.xlu0 %160
    %v164 = vlaneseq
    %v165 = vand.u32 %v164, 127
    %v166 = vperm.slane %v158, %v165
    %v167 = vperm.slane %v161, %v165
    %v168 = vsel %vm110, %v167, %v166
    %vm170 = vcmask 58368
    %v171 = vsel %vm170, %v168, -inf
    %172 = vmax.xlane.f32.xlu0 %v171
    %v173 = vpop.xlane.xlu0 %172
    %v175 = vperm.slane %v173, 0
    %v176 = vperm.slane %v173, 1
    %v179 = vsub.f32 %v158, %v175
    %v180 = vsub.f32 %v161, %v176
    %v181 = vmul.f32 %v179, 1.442695
    %v182 = vpow.pop %v181
    %v183 = vmul.f32 %v180, 1.442695
    %v184 = vpow.pop %v183
    %187 = vset.pattern.permute.xlu0 0
    %188 = vperm.xlu0 %187, %v182
    %v189 = vpop.permute.xlu0 %188
    %190 = vset.pattern.permute.xlu0 0
    %191 = vperm.xlu0 %190, %v184
    %v192 = vpop.permute.xlu0 %191
    %v193 = vperm.slane %v189, %v165
    %v194 = vperm.slane %v192, %v165
    %v195 = vsel %vm110, %v194, %v193
    %v197 = vsel %vm170, %v195, 0.0
    %198 = vadd.xlane.f32.xlu0 %v197
    %v199 = vpop.xlane.xlu0 %198
    %v201 = vperm.slane %v199, 0
    %v202 = vperm.slane %v199, 1
    %v205 = vrcp.pop %v201
    %v206 = vmul.f32 %v201, %v205
    %v207 = vsub.f32 1.0, %v206
    %v208 = vmul.f32 %v205, %v207
    %v209 = vadd.f32 %v205, %v208
    %vm210 = vweird.f32 %v201
    %vm211 = vweird.f32 %v205
    %vm212 = vmor %vm210, %vm211
    %v213 = vsel %vm212, %v205, %v209
    %v214 = vand.u32 2147483647, %v201
    %vm215 = vcmp.eq.f32.partialorder %v214, 8.507059e+37
    %v216 = vand.u32 %v201, 2147483648
    %v217 = vor.u32 1.1754944e-38, %v216
    %v218 = vsel %vm215, %v217, %v213
    %v219 = vmul.f32 %v182, %v218
    %v220 = vrcp.pop %v202
    %v221 = vmul.f32 %v202, %v220
    %v222 = vsub.f32 1.0, %v221
    %v223 = vmul.f32 %v220, %v222
    %v224 = vadd.f32 %v220, %v223
    %vm225 = vweird.f32 %v202
    %vm226 = vweird.f32 %v220
    %vm227 = vmor %vm225, %vm226
    %v228 = vsel %vm227, %v220, %v224
    %v229 = vand.u32 2147483647, %v202
    %vm230 = vcmp.eq.f32.partialorder %v229, 8.507059e+37
    %v231 = vand.u32 %v202, 2147483648
    %v232 = vor.u32 1.1754944e-38, %v231
    %v233 = vsel %vm230, %v232, %v228
    %v234 = vmul.f32 %v184, %v233
    %236 = vset.pattern.permute.xlu0 0
    %237 = vperm.xlu0 %236, %v219
    %v238 = vpop.permute.xlu0 %237
    %241 = vset.pattern.permute.xlu0 0
    %242 = vperm.xlu0 %241, %v234
    %v243 = vpop.permute.xlu0 %242
    %v245 = vmul.f32 %v238, %v68
    %v246 = vmul.f32 %v243, %v69
    %v247 = vsel %vm74, %v245, 0.0
    %v248 = vrot.slane %v247, 4
    %v249 = vadd.f32 %v247, %v248
    %v250 = vrot.slane %v249, 2
    %v251 = vadd.f32 %v249, %v250
    %v252 = vrot.slane %v251, 1
    %v253 = vadd.f32 %v251, %v252
    %v254 = vsel %vm74, %v246, 0.0
    %v255 = vrot.slane %v254, 4
    %v256 = vadd.f32 %v254, %v255
    %v257 = vrot.slane %v256, 2
    %v258 = vadd.f32 %v256, %v257
    %v259 = vrot.slane %v258, 1
    %v260 = vadd.f32 %v258, %v259
    %v263 = vsel %vm110, %v260, %v253
    %vm265 = vcmask 254976
    %266 = vst.msk [vmem:[#allocation8] sm:$0x3] %vm265, %v263
    // Predicated region
    $region34: #{tpu_custom_call.1} parent=1 // pred_check
      _
    $region35: #{tpu_custom_call.1} parent=1 // pred_check_branch
      %268 = sbr.rel (0) target = $region37
    $region36: #{tpu_custom_call.1} parent=1 // pred_region
      %270 = vsyncadd [#allocation4], 0
      %s272 = sshll.u32 [#allocation8], 4
      %s273 = int_to_ptr.vmem [resolvable:$true] %s272
      %s274 = sshll.u32 %s5, 4
      %s275 = int_to_ptr.hbm [resolvable:$true] %s274
      %277 = dma.vmem_to_hbm [thread:$0]  %s273, 32, %s275, [#allocation4]
    $region37: #{tpu_custom_call.1} parent=1 // pred_fallthru
      _
    // Predicated region
    $region38: #{tpu_custom_call.1} parent=1 // pred_check
      _
    $region39: #{tpu_custom_call.1} parent=1 // pred_check_branch
      %279 = sbr.rel (0) target = $region41
    $region40: #{tpu_custom_call.1} parent=1 // pred_region
      %281 = dma.done [#allocation4], 32
    $region41: #{tpu_custom_call.1} parent=1 // pred_fallthru
      _
    %282 = vsyncpa [#allocation3], 1
    %283 = vsyncpa [#allocation6], 1
    %284 = vsyncpa [#allocation4], 1

</llo_original>
